<compile_context>
chip_gen: v6e
topology: v6e:2x2x1
jax: 0.10.0
libtpu: 0.0.40
codegen_flags: <defaults>
</compile_context>

<pallas_src>
import functools

import jax
import jax.numpy as jnp
from jax import lax
from jax.experimental import pallas as pl
from jax.experimental.pallas import tpu as pltpu


# Architecture constants fixed by the PyTorch module.
_D_QK = 5        # W_Q / W_K / W_V output dim
_D_H = 4         # fc1 output dim
_W_LANES = 128   # weight-slab lane width (one aligned tile column)


def _slab_layout(len_x1, len_x2):
    """Static row layout of the packed weight slab."""
    d_act = max(len_x1, len_x2) + 1          # +1: constant-1 column folds bQ/bK/bV
    r_fc1 = ((d_act + 7) // 8) * 8           # sublane-aligned start of the fc1 block
    r_fc2 = r_fc1 + 8                        # sublane-aligned start of the fc2 block
    rows = r_fc2 + 8
    return d_act, r_fc1, r_fc2, rows


def _attention_kernel(act_ref, w_ref, out_ref, *, n1, d_act, r_fc1, r_fc2, ndim_out):
    """Whole forward pass, grid-less.

    act_ref : (n1+n2, d_act)  rows 0:n1 = [x1 | 0 | 1], rows n1: = [x2 | 0 | 1]
    w_ref   : (rows, 128)     packed weight slab (see pack_params)
    out_ref : (n1, ndim_out)
    """
    act = act_ref[...]
    w = w_ref[...]

    # --- fused Q/K/V projection: ONE MXU push; biases folded via act's 1-column.
    # Weight columns: 0:5 -> Q, 5:10 -> K, 10:15 -> V, 15 -> constant-1 passthrough.
    wqkv = w[0:d_act, 0:3 * _D_QK + 1]                                   # (d_act, 16)
    qkv = jnp.dot(act, wqkv, preferred_element_type=jnp.float32)         # (n1+n2, 16)
    q1 = qkv[0:n1, 0:_D_QK]                                              # (n1, 5)
    k2 = qkv[n1:, _D_QK:2 * _D_QK]                                       # (n2, 5)
    v2a = qkv[n1:, 2 * _D_QK:3 * _D_QK + 1]                              # (n2, 6), col 5 == 1

    # --- scores = Q1 @ K2^T, contracting the last dims (no materialized transpose).
    scores = lax.dot_general(q1, k2, (((1,), (1,)), ((), ())),
                             preferred_element_type=jnp.float32)         # (n1, n2)

    # --- numerically stable softmax; EUP reciprocal instead of a VALU divide.
    m = jnp.max(scores, axis=-1, keepdims=True)
    p = jnp.exp(scores - m)
    denom = jnp.sum(p, axis=-1, keepdims=True)
    attn = p * pl.reciprocal(denom, approx=True)

    # --- context; last column carries sum(attn) ~= 1, which folds b1 (and later b2).
    ctx = jnp.dot(attn, v2a, preferred_element_type=jnp.float32)         # (n1, 6)

    # --- fc1 (+ folded b1) and ReLU; output column _D_H carries the ~1 constant.
    w1b1 = w[r_fc1:r_fc1 + _D_QK + 1, 0:_D_H + 1]                        # (6, 5)
    h = jnp.maximum(jnp.dot(ctx, w1b1, preferred_element_type=jnp.float32), 0.0)  # (n1, 5)

    # --- fc2 (+ folded b2), direct (n1, ndim_out) store.
    w2b2 = w[r_fc2:r_fc2 + _D_H + 1, 0:ndim_out]                         # (5, ndim_out)
    out = jnp.dot(h, w2b2, preferred_element_type=jnp.float32)           # (n1, ndim_out)
    out_ref[...] = out.astype(out_ref.dtype)


def pack_params(params):
    """One-time re-layout of PyTorch-convention params into a single weight slab."""
    len_x1 = int(params["WQ"].shape[1])
    len_x2 = int(params["WK"].shape[1])
    ndim_out = int(params["W2"].shape[0])
    d_act, r_fc1, r_fc2, rows = _slab_layout(len_x1, len_x2)

    w = jnp.zeros((rows, _W_LANES), jnp.float32)

    # Block A (rows 0:d_act): [WQ^T | WK^T | WV^T | 1-passthrough]; biases in row d_act-1.
    w = w.at[0:len_x1, 0:_D_QK].set(params["WQ"].T.astype(jnp.float32))
    w = w.at[0:len_x2, _D_QK:2 * _D_QK].set(params["WK"].T.astype(jnp.float32))
    w = w.at[0:len_x2, 2 * _D_QK:3 * _D_QK].set(params["WV"].T.astype(jnp.float32))
    w = w.at[d_act - 1, 0:_D_QK].set(params["bQ"].astype(jnp.float32))
    w = w.at[d_act - 1, _D_QK:2 * _D_QK].set(params["bK"].astype(jnp.float32))
    w = w.at[d_act - 1, 2 * _D_QK:3 * _D_QK].set(params["bV"].astype(jnp.float32))
    w = w.at[d_act - 1, 3 * _D_QK].set(1.0)

    # Block B (rows r_fc1:r_fc1+6): [W1^T ; b1] plus a constant column for b2 folding.
    w = w.at[r_fc1:r_fc1 + _D_QK, 0:_D_H].set(params["W1"].T.astype(jnp.float32))
    w = w.at[r_fc1 + _D_QK, 0:_D_H].set(params["b1"].astype(jnp.float32))
    w = w.at[r_fc1 + _D_QK, _D_H].set(1.0)

    # Block C (rows r_fc2:r_fc2+5): [W2^T ; b2].
    w = w.at[r_fc2:r_fc2 + _D_H, 0:ndim_out].set(params["W2"].T.astype(jnp.float32))
    w = w.at[r_fc2 + _D_H, 0:ndim_out].set(params["b2"].astype(jnp.float32))

    return dict(wslab=w, ndim_out=ndim_out)


@functools.partial(jax.jit, static_argnames=("ndim_out",))
def _forward_impl(x1, x2, wslab, *, ndim_out):
    n1, len_x1 = x1.shape
    n2, len_x2 = x2.shape
    d_act, r_fc1, r_fc2, _ = _slab_layout(len_x1, len_x2)

    # Stacked, bias-augmented activation slab: one input DMA, one fused QKV push.
    # (XLA fuses these updates into a single small fusion; if the caller can
    #  supply the stacked slab directly, this disappears entirely.)
    act = jnp.zeros((n1 + n2, d_act), jnp.float32)
    act = act.at[:n1, :len_x1].set(x1.astype(jnp.float32))
    act = act.at[n1:, :len_x2].set(x2.astype(jnp.float32))
    act = act.at[:, d_act - 1].set(1.0)

    kernel = functools.partial(_attention_kernel, n1=n1, d_act=d_act,
                               r_fc1=r_fc1, r_fc2=r_fc2, ndim_out=ndim_out)
    vmem = pl.BlockSpec(memory_space=pltpu.MemorySpace.VMEM)
    return pl.pallas_call(
        kernel,
        out_shape=jax.ShapeDtypeStruct((n1, ndim_out), jnp.float32),
        in_specs=[vmem, vmem],
        out_specs=vmem,
    )(act, wslab)


def simple_attention_forward(x1, x2, packed):
    """Forward pass using pre-packed params from pack_params()."""
    return _forward_impl(x1, x2, packed["wslab"], ndim_out=packed["ndim_out"])


def _reference_forward(x1, x2, p):
    q1 = x1 @ p["WQ"].T + p["bQ"]
    k2 = x2 @ p["WK"].T + p["bK"]
    v2 = x2 @ p["WV"].T + p["bV"]
    attn = jax.nn.softmax(q1 @ k2.T, axis=-1)
    out = attn @ v2
    out = jnp.maximum(out @ p["W1"].T + p["b1"], 0.0)
    return out @ p["W2"].T + p["b2"]


def _init_params(key, len_x1, len_x2, ndim_out):
    ks = jax.random.split(key, 10)

    def lin(kw, kb, out_f, in_f):
        # nn.Linear default: U(-1/sqrt(in), 1/sqrt(in)) for both W and b.
        bound = 1.0 / jnp.sqrt(jnp.float32(in_f))
        w = jax.random.uniform(kw, (out_f, in_f), jnp.float32, -bound, bound)
        b = jax.random.uniform(kb, (out_f,), jnp.float32, -bound, bound)
        return w, b

    WQ, bQ = lin(ks[0], ks[1], 5, len_x1)
    WK, bK = lin(ks[2], ks[3], 5, len_x2)
    WV, bV = lin(ks[4], ks[5], 5, len_x2)
    W1, b1 = lin(ks[6], ks[7], 4, 5)
    W2, b2 = lin(ks[8], ks[9], ndim_out, 4)
    return dict(WQ=WQ, bQ=bQ, WK=WK, bK=bK, WV=WV, bV=bV,
                W1=W1, b1=b1, W2=W2, b2=b2)


if __name__ == "__main__":
    len_x1, len_x2, ndim_out = 7, 6, 1
    n1, n2 = 8, 8

    key = jax.random.PRNGKey(0)
    k_x1, k_x2, k_p = jax.random.split(key, 3)
    x1 = jax.random.uniform(k_x1, (n1, len_x1), jnp.float32)
    x2 = jax.random.uniform(k_x2, (n2, len_x2), jnp.float32)
    params = _init_params(k_p, len_x1, len_x2, ndim_out)

    packed = pack_params(params)            # one-time weight re-layout
    out = simple_attention_forward(x1, x2, packed)
    out = jax.block_until_ready(out)

    ref = _reference_forward(x1, x2, params)
    assert out.shape == (n1, ndim_out)
    # Tolerance relaxed for the approx (EUP vrcp) softmax reciprocal (~2^-12 rel).
    assert jnp.allclose(out, ref, atol=5e-3, rtol=5e-3), "mismatch vs pure-JAX reference"

    print("KERNEL_OK")
</pallas_src>

<mosaic_0001>
module attributes {stable_mosaic.version = 11 : i64} {
  func.func @_attention_kernel(%arg0: memref<16x8xf32, #tpu.memory_space<vmem>>, %arg1: memref<24x128xf32, #tpu.memory_space<vmem>>, %arg2: memref<8x1xf32, #tpu.memory_space<vmem>>) attributes {dimension_semantics = [], scalar_prefetch = 0 : i64, scratch_operands = 0 : i64, tpu.core_type = #tpu.core_type<tc>} {
    %c0 = arith.constant 0 : index
    %c0_0 = arith.constant 0 : index
    %0 = vector.load %arg0[%c0, %c0_0] : memref<16x8xf32, #tpu.memory_space<vmem>>, vector<16x8xf32>
    %c0_1 = arith.constant 0 : index
    %c0_2 = arith.constant 0 : index
    %1 = vector.load %arg1[%c0_1, %c0_2] : memref<24x128xf32, #tpu.memory_space<vmem>>, vector<24x128xf32>
    %2 = vector.extract_strided_slice %1 {offsets = [0, 0], sizes = [8, 16], strides = [1, 1]} : vector<24x128xf32> to vector<8x16xf32>
    %cst = arith.constant dense<0.000000e+00> : vector<16x16xf32>
    %3 = tpu.matmul %0, %2, %cst {dimension_numbers = #tpu.dot_dimension_numbers<[1], [0], [0], [1], [0, 0, 1, 1], [], []>} : vector<16x8xf32>, vector<8x16xf32>, vector<16x16xf32> -> vector<16x16xf32>
    %4 = vector.extract_strided_slice %3 {offsets = [0, 0], sizes = [8, 5], strides = [1, 1]} : vector<16x16xf32> to vector<8x5xf32>
    %5 = vector.extract_strided_slice %3 {offsets = [8, 5], sizes = [8, 5], strides = [1, 1]} : vector<16x16xf32> to vector<8x5xf32>
    %6 = vector.extract_strided_slice %3 {offsets = [8, 10], sizes = [8, 6], strides = [1, 1]} : vector<16x16xf32> to vector<8x6xf32>
    %cst_3 = arith.constant dense<0.000000e+00> : vector<8x8xf32>
    %7 = tpu.matmul %4, %5, %cst_3 {dimension_numbers = #tpu.dot_dimension_numbers<[1], [1], [0], [0], [0, 0, 1, 0], [], []>} : vector<8x5xf32>, vector<8x5xf32>, vector<8x8xf32> -> vector<8x8xf32>
    %cst_4 = arith.constant dense<0xFF800000> : vector<8xf32>
    %8 = vector.multi_reduction <maximumf>, %7, %cst_4 [1] : vector<8x8xf32> to vector<8xf32>
    %9 = vector.shape_cast %8 : vector<8xf32> to vector<8x1xf32>
    %10 = vector.broadcast %9 : vector<8x1xf32> to vector<8x8xf32>
    %11 = arith.subf %7, %10 : vector<8x8xf32>
    %12 = math.exp %11 : vector<8x8xf32>
    %cst_5 = arith.constant dense<0.000000e+00> : vector<8xf32>
    %13 = vector.multi_reduction <add>, %12, %cst_5 [1] : vector<8x8xf32> to vector<8xf32>
    %14 = vector.shape_cast %13 : vector<8xf32> to vector<8x1xf32>
    %15 = tpu.reciprocal %14 {approx = true} : vector<8x1xf32> -> vector<8x1xf32>
    %16 = vector.broadcast %15 : vector<8x1xf32> to vector<8x8xf32>
    %17 = arith.mulf %12, %16 : vector<8x8xf32>
    %cst_6 = arith.constant dense<0.000000e+00> : vector<8x6xf32>
    %18 = tpu.matmul %17, %6, %cst_6 {dimension_numbers = #tpu.dot_dimension_numbers<[1], [0], [0], [1], [0, 0, 1, 1], [], []>} : vector<8x8xf32>, vector<8x6xf32>, vector<8x6xf32> -> vector<8x6xf32>
    %19 = vector.extract_strided_slice %1 {offsets = [8, 0], sizes = [6, 5], strides = [1, 1]} : vector<24x128xf32> to vector<6x5xf32>
    %cst_7 = arith.constant dense<0.000000e+00> : vector<8x5xf32>
    %20 = tpu.matmul %18, %19, %cst_7 {dimension_numbers = #tpu.dot_dimension_numbers<[1], [0], [0], [1], [0, 0, 1, 1], [], []>} : vector<8x6xf32>, vector<6x5xf32>, vector<8x5xf32> -> vector<8x5xf32>
    %cst_8 = arith.constant 0.000000e+00 : f32
    %21 = vector.broadcast %cst_8 : f32 to vector<8x5xf32>
    %22 = arith.maximumf %20, %21 : vector<8x5xf32>
    %23 = vector.extract_strided_slice %1 {offsets = [16, 0], sizes = [5, 1], strides = [1, 1]} : vector<24x128xf32> to vector<5x1xf32>
    %cst_9 = arith.constant dense<0.000000e+00> : vector<8x1xf32>
    %24 = tpu.matmul %22, %23, %cst_9 {dimension_numbers = #tpu.dot_dimension_numbers<[1], [0], [0], [1], [0, 0, 1, 1], [], []>} : vector<8x5xf32>, vector<5x1xf32>, vector<8x1xf32> -> vector<8x1xf32>
    %c0_10 = arith.constant 0 : index
    %c0_11 = arith.constant 0 : index
    %25 = vector.load %arg2[%c0_10, %c0_11] : memref<8x1xf32, #tpu.memory_space<vmem>>, vector<8x1xf32>
    tpu.vector_store %arg2[%c0_10, %c0_11], %24 {strides = array<i32>} : memref<8x1xf32, #tpu.memory_space<vmem>>, vector<8x1xf32>,
    return
  }
}

</mosaic_0001>

<llo_original>
// kernel: _forward_impl.1
$region0: #{_forward_impl.1}
  #allocation0 [shape = 'u32[]', space=smem, size = 0x4, offset = 0x4, fixed_abs, tag = 'smem constant byte address 0x4 - core index']
  #allocation1 [shape = 'u32[144,128]{1,0:T(1,128)}', space=vmem, size = 0x12000, scoped, tag = 'internal scratch']
  %s0 = inlined_call_operand.vmem [shape: f32[16,8], index: 0, kind: input, shape index: {}]
  %s1 = inlined_call_operand.vmem [shape: f32[24,128], index: 1, kind: input, shape index: {}]
  %s2 = inlined_call_operand.vmem [shape: f32[8,1], index: 2, kind: output, shape index: {}]
  %s3 = sld [smem:[#allocation0]]
  $region18: #{_forward_impl.1} parent=0
    _
  %s5 = ssub.s32 1, %s3
  %s6 = scalar_select 0, %s5, %s3
  // Predicated region
  $region2: #{_forward_impl.1} parent=0 // pred_check
    _
  $region3: #{_forward_impl.1} parent=0 // pred_check_branch
    %8 = sbr.rel (0) target = $region5
  $region4: #{_forward_impl.1} parent=0 // pred_region
    _
  $region5: #{_forward_impl.1} parent=0 // pred_fallthru
    _
  // Predicated region
  $region6: #{_forward_impl.1} parent=0 // pred_check
    _
  $region7: #{_forward_impl.1} parent=0 // pred_check_branch
    %10 = sbr.rel (0) target = $region9
  $region8: #{_forward_impl.1} parent=0 // pred_region
    _
  $region9: #{_forward_impl.1} parent=0 // pred_fallthru
    _
  %v11 = vld [vmem:[%s0] sm:$0xff]
  %v12 = vld [vmem:[%s0 + $0x8] sm:$0xff]
  %v13 = vld [vmem:[%s1] sm:$0xff]
  %v14 = vld [vmem:[%s1 + $0x8] sm:$0xff]
  %v15 = vld [vmem:[%s1 + $0x10] sm:$0xff]
  %vm16 = vcmask 64512
  %v18 = vsel %vm16, %v11, 0
  %v21 = vsel %vm16, %v12, 0
  %23 = vmatprep.subr.mxu0 0.0
  %24 = vmatpush1.msra.mxu0 0.0
  %25 = vmatprep.subr.mxu0 0.0
  %26 = vmatpush1.msra.mxu0 0.0
  %27 = vmatprep.subr.mxu0 0.0
  %28 = vmatpush1.msra.mxu0 0.0
  %29 = vmatprep.subr.mxu0 0.0
  %30 = vmatpush1.msra.mxu0 0.0
  %31 = vmatprep.subr.mxu0 0.0
  %32 = vmatpush1.msra.mxu0 0.0
  %33 = vmatprep.subr.mxu0 0.0
  %34 = vmatpush1.msra.mxu0 0.0
  %35 = vmatprep.subr.mxu0 0.0
  %36 = vmatpush1.msra.mxu0 0.0
  %37 = vmatprep.subr.mxu0 0.0
  %38 = vmatpush1.msra.mxu0 0.0
  %39 = vmatprep.subr.mxu0 0.0
  %40 = vmatpush1.msra.mxu0 0.0
  %41 = vmatprep.subr.mxu0 0.0
  %42 = vmatpush1.msra.mxu0 0.0
  %43 = vmatprep.subr.mxu0 0.0
  %44 = vmatpush1.msra.mxu0 0.0
  %45 = vmatprep.subr.mxu0 0.0
  %46 = vmatpush1.msra.mxu0 0.0
  %47 = vmatprep.subr.mxu0 0.0
  %48 = vmatpush1.msra.mxu0 0.0
  %49 = vmatprep.subr.mxu0 0.0
  %50 = vmatpush1.msra.mxu0 0.0
  %51 = vmatprep.subr.mxu0 0.0
  %52 = vmatpush1.msra.mxu0 0.0
  %53 = vmatprep.subr.mxu0 0.0
  %54 = vmatpush1.msra.mxu0 %v13
  %55 = vmatprep.subr.mxu0 0.0
  %56 = vmatpush2.msra.mxu0 0.0
  %57 = vmatprep.subr.mxu0 0.0
  %58 = vmatpush2.msra.mxu0 0.0
  %59 = vmatprep.subr.mxu0 0.0
  %60 = vmatpush2.msra.mxu0 0.0
  %61 = vmatprep.subr.mxu0 0.0
  %62 = vmatpush2.msra.mxu0 0.0
  %63 = vmatprep.subr.mxu0 0.0
  %64 = vmatpush2.msra.mxu0 0.0
  %65 = vmatprep.subr.mxu0 0.0
  %66 = vmatpush2.msra.mxu0 0.0
  %67 = vmatprep.subr.mxu0 0.0
  %68 = vmatpush2.msra.mxu0 0.0
  %69 = vmatprep.subr.mxu0 0.0
  %70 = vmatpush2.msra.mxu0 0.0
  %71 = vmatprep.subr.mxu0 0.0
  %72 = vmatpush2.msra.mxu0 0.0
  %73 = vmatprep.subr.mxu0 0.0
  %74 = vmatpush2.msra.mxu0 0.0
  %75 = vmatprep.subr.mxu0 0.0
  %76 = vmatpush2.msra.mxu0 0.0
  %77 = vmatprep.subr.mxu0 0.0
  %78 = vmatpush2.msra.mxu0 0.0
  %79 = vmatprep.subr.mxu0 0.0
  %80 = vmatpush2.msra.mxu0 0.0
  %81 = vmatprep.subr.mxu0 0.0
  %82 = vmatpush2.msra.mxu0 0.0
  %83 = vmatprep.subr.mxu0 0.0
  %84 = vmatpush2.msra.mxu0 0.0
  %85 = vmatprep.subr.mxu0 0.0
  %86 = vmatpush2.msra.mxu0 0.0
  %87 = vmatprep.mubr.f32.mxu0 0.0
  %88 = vmatmul.mubr.f32.gmra.mxu0 %v18
  %v89 = vpop.f32.mrf.mxu0
  %v90 = vadd.f32 0.0, %v89
  %v91 = vpop.f32.mrf.mxu0
  %92 = vmatprep.mubr.f32.mxu0 0.0
  %93 = vmatmul.mubr.f32.gmra.mxu0 %v21
  %v94 = vpop.f32.mrf.mxu0
  %v95 = vadd.f32 0.0, %v94
  %v96 = vpop.f32.mrf.mxu0
  %97 = vdwg.mxu0
  %99 = vrot.lane.b32.xlu0 %v95, 123
  %v100 = vpop.permute.xlu0 %99
  %vm101 = vcmask 39936
  %v103 = vsel %vm101, %v90, 0
  %v105 = vsel %vm101, %v100, 0
  %107 = vmatprep.subr.mxu0 0.0
  %108 = vmatpush1.xpose.msra.mxu0 0.0
  %109 = vmatprep.subr.mxu0 0.0
  %110 = vmatpush1.xpose.msra.mxu0 0.0
  %111 = vmatprep.subr.mxu0 0.0
  %112 = vmatpush1.xpose.msra.mxu0 0.0
  %113 = vmatprep.subr.mxu0 0.0
  %114 = vmatpush1.xpose.msra.mxu0 0.0
  %115 = vmatprep.subr.mxu0 0.0
  %116 = vmatpush1.xpose.msra.mxu0 0.0
  %117 = vmatprep.subr.mxu0 0.0
  %118 = vmatpush1.xpose.msra.mxu0 0.0
  %119 = vmatprep.subr.mxu0 0.0
  %120 = vmatpush1.xpose.msra.mxu0 0.0
  %121 = vmatprep.subr.mxu0 0.0
  %122 = vmatpush1.xpose.msra.mxu0 0.0
  %123 = vmatprep.subr.mxu0 0.0
  %124 = vmatpush1.xpose.msra.mxu0 0.0
  %125 = vmatprep.subr.mxu0 0.0
  %126 = vmatpush1.xpose.msra.mxu0 0.0
  %127 = vmatprep.subr.mxu0 0.0
  %128 = vmatpush1.xpose.msra.mxu0 0.0
  %129 = vmatprep.subr.mxu0 0.0
  %130 = vmatpush1.xpose.msra.mxu0 0.0
  %131 = vmatprep.subr.mxu0 0.0
  %132 = vmatpush1.xpose.msra.mxu0 0.0
  %133 = vmatprep.subr.mxu0 0.0
  %134 = vmatpush1.xpose.msra.mxu0 0.0
  %135 = vmatprep.subr.mxu0 0.0
  %136 = vmatpush1.xpose.msra.mxu0 0.0
  %137 = vmatprep.subr.mxu0 0.0
  %138 = vmatpush1.xpose.msra.mxu0 %v105
  %139 = vmatprep.subr.mxu0 0.0
  %140 = vmatpush2.xpose.msra.mxu0 0.0
  %141 = vmatprep.subr.mxu0 0.0
  %142 = vmatpush2.xpose.msra.mxu0 0.0
  %143 = vmatprep.subr.mxu0 0.0
  %144 = vmatpush2.xpose.msra.mxu0 0.0
  %145 = vmatprep.subr.mxu0 0.0
  %146 = vmatpush2.xpose.msra.mxu0 0.0
  %147 = vmatprep.subr.mxu0 0.0
  %148 = vmatpush2.xpose.msra.mxu0 0.0
  %149 = vmatprep.subr.mxu0 0.0
  %150 = vmatpush2.xpose.msra.mxu0 0.0
  %151 = vmatprep.subr.mxu0 0.0
  %152 = vmatpush2.xpose.msra.mxu0 0.0
  %153 = vmatprep.subr.mxu0 0.0
  %154 = vmatpush2.xpose.msra.mxu0 0.0
  %155 = vmatprep.subr.mxu0 0.0
  %156 = vmatpush2.xpose.msra.mxu0 0.0
  %157 = vmatprep.subr.mxu0 0.0
  %158 = vmatpush2.xpose.msra.mxu0 0.0
  %159 = vmatprep.subr.mxu0 0.0
  %160 = vmatpush2.xpose.msra.mxu0 0.0
  %161 = vmatprep.subr.mxu0 0.0
  %162 = vmatpush2.xpose.msra.mxu0 0.0
  %163 = vmatprep.subr.mxu0 0.0
  %164 = vmatpush2.xpose.msra.mxu0 0.0
  %165 = vmatprep.subr.mxu0 0.0
  %166 = vmatpush2.xpose.msra.mxu0 0.0
  %167 = vmatprep.subr.mxu0 0.0
  %168 = vmatpush2.xpose.msra.mxu0 0.0
  %169 = vmatprep.subr.mxu0 0.0
  %170 = vmatpush2.xpose.msra.mxu0 0.0
  %171 = vmatprep.mubr.f32.mxu0 0.0
  %172 = vmatmul.mubr.f32.gmra.mxu0 %v103
  %v173 = vpop.f32.mrf.mxu0
  %v174 = vadd.f32 0.0, %v173
  %v175 = vpop.f32.mrf.mxu0
  %176 = vdwg.mxu0
  %v177 = vsel %vm16, %v174, -inf
  %178 = vmax.xlane.f32.xlu0 %v177
  %v179 = vpop.xlane.xlu0 %178
  %v180 = vsub.f32 %v174, %v179
  %v181 = vmul.f32 %v180, 1.442695
  %v182 = vpow.pop %v181
  %v183 = vsel %vm16, %v182, 0.0
  %184 = vadd.xlane.f32.xlu0 %v183
  %v185 = vpop.xlane.xlu0 %184
  %v186 = vrcp.pop %v185
  %v187 = vmul.f32 %v182, %v186
  %188 = vrot.lane.b32.xlu0 %v95, 118
  %v189 = vpop.permute.xlu0 %188
  %v192 = vsel %vm16, %v187, 0
  %194 = vmatprep.subr.mxu0 0.0
  %195 = vmatpush1.msra.mxu0 0.0
  %196 = vmatprep.subr.mxu0 0.0
  %197 = vmatpush1.msra.mxu0 0.0
  %198 = vmatprep.subr.mxu0 0.0
  %199 = vmatpush1.msra.mxu0 0.0
  %200 = vmatprep.subr.mxu0 0.0
  %201 = vmatpush1.msra.mxu0 0.0
  %202 = vmatprep.subr.mxu0 0.0
  %203 = vmatpush1.msra.mxu0 0.0
  %204 = vmatprep.subr.mxu0 0.0
  %205 = vmatpush1.msra.mxu0 0.0
  %206 = vmatprep.subr.mxu0 0.0
  %207 = vmatpush1.msra.mxu0 0.0
  %208 = vmatprep.subr.mxu0 0.0
  %209 = vmatpush1.msra.mxu0 0.0
  %210 = vmatprep.subr.mxu0 0.0
  %211 = vmatpush1.msra.mxu0 0.0
  %212 = vmatprep.subr.mxu0 0.0
  %213 = vmatpush1.msra.mxu0 0.0
  %214 = vmatprep.subr.mxu0 0.0
  %215 = vmatpush1.msra.mxu0 0.0
  %216 = vmatprep.subr.mxu0 0.0
  %217 = vmatpush1.msra.mxu0 0.0
  %218 = vmatprep.subr.mxu0 0.0
  %219 = vmatpush1.msra.mxu0 0.0
  %220 = vmatprep.subr.mxu0 0.0
  %221 = vmatpush1.msra.mxu0 0.0
  %222 = vmatprep.subr.mxu0 0.0
  %223 = vmatpush1.msra.mxu0 0.0
  %224 = vmatprep.subr.mxu0 0.0
  %225 = vmatpush1.msra.mxu0 %v189
  %226 = vmatprep.subr.mxu0 0.0
  %227 = vmatpush2.msra.mxu0 0.0
  %228 = vmatprep.subr.mxu0 0.0
  %229 = vmatpush2.msra.mxu0 0.0
  %230 = vmatprep.subr.mxu0 0.0
  %231 = vmatpush2.msra.mxu0 0.0
  %232 = vmatprep.subr.mxu0 0.0
  %233 = vmatpush2.msra.mxu0 0.0
  %234 = vmatprep.subr.mxu0 0.0
  %235 = vmatpush2.msra.mxu0 0.0
  %236 = vmatprep.subr.mxu0 0.0
  %237 = vmatpush2.msra.mxu0 0.0
  %238 = vmatprep.subr.mxu0 0.0
  %239 = vmatpush2.msra.mxu0 0.0
  %240 = vmatprep.subr.mxu0 0.0
  %241 = vmatpush2.msra.mxu0 0.0
  %242 = vmatprep.subr.mxu0 0.0
  %243 = vmatpush2.msra.mxu0 0.0
  %244 = vmatprep.subr.mxu0 0.0
  %245 = vmatpush2.msra.mxu0 0.0
  %246 = vmatprep.subr.mxu0 0.0
  %247 = vmatpush2.msra.mxu0 0.0
  %248 = vmatprep.subr.mxu0 0.0
  %249 = vmatpush2.msra.mxu0 0.0
  %250 = vmatprep.subr.mxu0 0.0
  %251 = vmatpush2.msra.mxu0 0.0
  %252 = vmatprep.subr.mxu0 0.0
  %253 = vmatpush2.msra.mxu0 0.0
  %254 = vmatprep.subr.mxu0 0.0
  %255 = vmatpush2.msra.mxu0 0.0
  %256 = vmatprep.subr.mxu0 0.0
  %257 = vmatpush2.msra.mxu0 0.0
  %258 = vmatprep.mubr.f32.mxu0 0.0
  %259 = vmatmul.mubr.f32.gmra.mxu0 %v192
  %v260 = vpop.f32.mrf.mxu0
  %v261 = vadd.f32 0.0, %v260
  %v262 = vpop.f32.mrf.mxu0
  %263 = vdwg.mxu0
  %vm264 = vcmask 48128
  %v266 = vsel %vm264, %v261, 0
  %vm268 = vcmask 1045504
  %v270 = vsel %vm268, %v14, 0
  %272 = vmatprep.subr.mxu0 0.0
  %273 = vmatpush1.msra.mxu0 0.0
  %274 = vmatprep.subr.mxu0 0.0
  %275 = vmatpush1.msra.mxu0 0.0
  %276 = vmatprep.subr.mxu0 0.0
  %277 = vmatpush1.msra.mxu0 0.0
  %278 = vmatprep.subr.mxu0 0.0
  %279 = vmatpush1.msra.mxu0 0.0
  %280 = vmatprep.subr.mxu0 0.0
  %281 = vmatpush1.msra.mxu0 0.0
  %282 = vmatprep.subr.mxu0 0.0
  %283 = vmatpush1.msra.mxu0 0.0
  %284 = vmatprep.subr.mxu0 0.0
  %285 = vmatpush1.msra.mxu0 0.0
  %286 = vmatprep.subr.mxu0 0.0
  %287 = vmatpush1.msra.mxu0 0.0
  %288 = vmatprep.subr.mxu0 0.0
  %289 = vmatpush1.msra.mxu0 0.0
  %290 = vmatprep.subr.mxu0 0.0
  %291 = vmatpush1.msra.mxu0 0.0
  %292 = vmatprep.subr.mxu0 0.0
  %293 = vmatpush1.msra.mxu0 0.0
  %294 = vmatprep.subr.mxu0 0.0
  %295 = vmatpush1.msra.mxu0 0.0
  %296 = vmatprep.subr.mxu0 0.0
  %297 = vmatpush1.msra.mxu0 0.0
  %298 = vmatprep.subr.mxu0 0.0
  %299 = vmatpush1.msra.mxu0 0.0
  %300 = vmatprep.subr.mxu0 0.0
  %301 = vmatpush1.msra.mxu0 0.0
  %302 = vmatprep.subr.mxu0 0.0
  %303 = vmatpush1.msra.mxu0 %v270
  %304 = vmatprep.subr.mxu0 0.0
  %305 = vmatpush2.msra.mxu0 0.0
  %306 = vmatprep.subr.mxu0 0.0
  %307 = vmatpush2.msra.mxu0 0.0
  %308 = vmatprep.subr.mxu0 0.0
  %309 = vmatpush2.msra.mxu0 0.0
  %310 = vmatprep.subr.mxu0 0.0
  %311 = vmatpush2.msra.mxu0 0.0
  %312 = vmatprep.subr.mxu0 0.0
  %313 = vmatpush2.msra.mxu0 0.0
  %314 = vmatprep.subr.mxu0 0.0
  %315 = vmatpush2.msra.mxu0 0.0
  %316 = vmatprep.subr.mxu0 0.0
  %317 = vmatpush2.msra.mxu0 0.0
  %318 = vmatprep.subr.mxu0 0.0
  %319 = vmatpush2.msra.mxu0 0.0
  %320 = vmatprep.subr.mxu0 0.0
  %321 = vmatpush2.msra.mxu0 0.0
  %322 = vmatprep.subr.mxu0 0.0
  %323 = vmatpush2.msra.mxu0 0.0
  %324 = vmatprep.subr.mxu0 0.0
  %325 = vmatpush2.msra.mxu0 0.0
  %326 = vmatprep.subr.mxu0 0.0
  %327 = vmatpush2.msra.mxu0 0.0
  %328 = vmatprep.subr.mxu0 0.0
  %329 = vmatpush2.msra.mxu0 0.0
  %330 = vmatprep.subr.mxu0 0.0
  %331 = vmatpush2.msra.mxu0 0.0
  %332 = vmatprep.subr.mxu0 0.0
  %333 = vmatpush2.msra.mxu0 0.0
  %334 = vmatprep.subr.mxu0 0.0
  %335 = vmatpush2.msra.mxu0 0.0
  %336 = vmatprep.mubr.f32.mxu0 0.0
  %337 = vmatmul.mubr.f32.gmra.mxu0 %v266
  %v338 = vpop.f32.mrf.mxu0
  %v339 = vadd.f32 0.0, %v338
  %v340 = vpop.f32.mrf.mxu0
  %341 = vdwg.mxu0
  %v342 = vmax.f32 %v339, 0.0
  %v344 = vsel %vm101, %v342, 0
  %vm346 = vcmask 1044480
  %v348 = vsel %vm346, %v15, 0
  %350 = vmatprep.subr.mxu0 0.0
  %351 = vmatpush1.msra.mxu0 0.0
  %352 = vmatprep.subr.mxu0 0.0
  %353 = vmatpush1.msra.mxu0 0.0
  %354 = vmatprep.subr.mxu0 0.0
  %355 = vmatpush1.msra.mxu0 0.0
  %356 = vmatprep.subr.mxu0 0.0
  %357 = vmatpush1.msra.mxu0 0.0
  %358 = vmatprep.subr.mxu0 0.0
  %359 = vmatpush1.msra.mxu0 0.0
  %360 = vmatprep.subr.mxu0 0.0
  %361 = vmatpush1.msra.mxu0 0.0
  %362 = vmatprep.subr.mxu0 0.0
  %363 = vmatpush1.msra.mxu0 0.0
  %364 = vmatprep.subr.mxu0 0.0
  %365 = vmatpush1.msra.mxu0 0.0
  %366 = vmatprep.subr.mxu0 0.0
  %367 = vmatpush1.msra.mxu0 0.0
  %368 = vmatprep.subr.mxu0 0.0
  %369 = vmatpush1.msra.mxu0 0.0
  %370 = vmatprep.subr.mxu0 0.0
  %371 = vmatpush1.msra.mxu0 0.0
  %372 = vmatprep.subr.mxu0 0.0
  %373 = vmatpush1.msra.mxu0 0.0
  %374 = vmatprep.subr.mxu0 0.0
  %375 = vmatpush1.msra.mxu0 0.0
  %376 = vmatprep.subr.mxu0 0.0
  %377 = vmatpush1.msra.mxu0 0.0
  %378 = vmatprep.subr.mxu0 0.0
  %379 = vmatpush1.msra.mxu0 0.0
  %380 = vmatprep.subr.mxu0 0.0
  %381 = vmatpush1.msra.mxu0 %v348
  %382 = vmatprep.subr.mxu0 0.0
  %383 = vmatpush2.msra.mxu0 0.0
  %384 = vmatprep.subr.mxu0 0.0
  %385 = vmatpush2.msra.mxu0 0.0
  %386 = vmatprep.subr.mxu0 0.0
  %387 = vmatpush2.msra.mxu0 0.0
  %388 = vmatprep.subr.mxu0 0.0
  %389 = vmatpush2.msra.mxu0 0.0
  %390 = vmatprep.subr.mxu0 0.0
  %391 = vmatpush2.msra.mxu0 0.0
  %392 = vmatprep.subr.mxu0 0.0
  %393 = vmatpush2.msra.mxu0 0.0
  %394 = vmatprep.subr.mxu0 0.0
  %395 = vmatpush2.msra.mxu0 0.0
  %396 = vmatprep.subr.mxu0 0.0
  %397 = vmatpush2.msra.mxu0 0.0
  %398 = vmatprep.subr.mxu0 0.0
  %399 = vmatpush2.msra.mxu0 0.0
  %400 = vmatprep.subr.mxu0 0.0
  %401 = vmatpush2.msra.mxu0 0.0
  %402 = vmatprep.subr.mxu0 0.0
  %403 = vmatpush2.msra.mxu0 0.0
  %404 = vmatprep.subr.mxu0 0.0
  %405 = vmatpush2.msra.mxu0 0.0
  %406 = vmatprep.subr.mxu0 0.0
  %407 = vmatpush2.msra.mxu0 0.0
  %408 = vmatprep.subr.mxu0 0.0
  %409 = vmatpush2.msra.mxu0 0.0
  %410 = vmatprep.subr.mxu0 0.0
  %411 = vmatpush2.msra.mxu0 0.0
  %412 = vmatprep.subr.mxu0 0.0
  %413 = vmatpush2.msra.mxu0 0.0
  %414 = vmatprep.mubr.f32.mxu0 0.0
  %415 = vmatmul.mubr.f32.gmra.mxu0 %v344
  %v416 = vpop.f32.mrf.mxu0
  %v417 = vadd.f32 0.0, %v416
  %v418 = vpop.f32.mrf.mxu0
  %419 = vdwg.mxu0
  %vm420 = vcmask 7168
  %421 = vst.msk [vmem:[%s2] sm:$0xff] %vm420, %v417
  // Predicated region
  $region10: #{_forward_impl.1} parent=0 // pred_check
    _
  $region11: #{_forward_impl.1} parent=0 // pred_check_branch
    %423 = sbr.rel (0) target = $region13
  $region12: #{_forward_impl.1} parent=0 // pred_region
    _
  $region13: #{_forward_impl.1} parent=0 // pred_fallthru
    _
  // Predicated region
  $region14: #{_forward_impl.1} parent=0 // pred_check
    _
  $region15: #{_forward_impl.1} parent=0 // pred_check_branch
    %425 = sbr.rel (0) target = $region17
  $region16: #{_forward_impl.1} parent=0 // pred_region
    _
  $region17: #{_forward_impl.1} parent=0 // pred_fallthru
    _

</llo_original>
